<compile_context>
chip_gen: v6e
topology: v6e:2x2x1
jax: 0.10.0
libtpu: 0.0.40
codegen_flags: <defaults>
</compile_context>

<pallas_src>
import functools

import jax
import jax.numpy as jnp
from jax.experimental import pallas as pl
from jax.experimental.pallas import tpu as pltpu


def _focal_tversky_partial_kernel(x_ref, t_ref, o_ref,
                                  acc_tp, acc_x, acc_t, *,
                                  hw, n_inner, n_tiles, need_mask):
    """Accumulate TP / sum(x) / sum(onehot) partials for one outer slice."""
    o = pl.program_id(0)
    i = pl.program_id(1)
    B, C, tile = x_ref.shape

    # --- init accumulators at the start of each outer slice -----------------
    @pl.when(i == 0)
    def _init():
        acc_tp[...] = jnp.zeros_like(acc_tp)
        acc_x[...] = jnp.zeros_like(acc_x)
        acc_t[...] = jnp.zeros_like(acc_t)

    x = x_ref[...].astype(jnp.float32)        # (B, C, TILE)  f32 accumulation
    t = t_ref[...].astype(jnp.int32)          # (B, 1, TILE)  labels

    def accumulate(valid):
        cls = jax.lax.broadcasted_iota(jnp.int32, (B, C, tile), 1)
        match = t == cls                                   # (B, C, TILE)
        in_range = jnp.logical_and(t >= 0, t < C)          # (B, 1, TILE)
        if valid is None:
            xv = x
        else:
            xv = jnp.where(valid, x, 0.0)
            in_range = jnp.logical_and(in_range, valid)
        acc_x[...] += xv                                   # sum(x)
        acc_tp[...] += jnp.where(match, xv, 0.0)           # sum(x * onehot)
        acc_t[...] += in_range.astype(jnp.float32)         # sum(onehot)

    if need_mask:
        g = o * n_inner + i                                # global tile index
        @pl.when(g == n_tiles - 1)
        def _tail():
            lane = jax.lax.broadcasted_iota(jnp.int32, (B, 1, tile), 2)
            accumulate(valid=(g * tile + lane) < hw)

        @pl.when(g != n_tiles - 1)
        def _body():
            accumulate(valid=None)
    else:
        accumulate(valid=None)

    # --- finalize: one cross-lane reduction per outer slice -----------------
    @pl.when(i == n_inner - 1)
    def _finalize():
        tp = jnp.sum(acc_tp[...])
        sx = jnp.sum(acc_x[...])
        st = jnp.sum(acc_t[...])
        row = jax.lax.broadcasted_iota(jnp.int32, (8, 128), 0)
        o_ref[0] = jnp.where(row == 0, tp,
                             jnp.where(row == 1, sx,
                                       jnp.where(row == 2, st, 0.0)))


def _choose_tile(hw, b, c, x_itemsize):
    """Lane tile: multiple of 128 (or full HW), sized for a ~24 MiB VMEM budget."""
    if hw % 128 == 0:
        tile = min(2048, hw)
    elif hw > 2048:
        tile = 2048
    else:
        return hw                      # full extent block is always legal

    c_pad = ((c + 7) // 8) * 8         # sublane padding of the class dim

    def vmem_bytes(t):
        x_buf = b * c_pad * t * x_itemsize     # input tile (native dtype)
        t_buf = b * 8 * t * 4                  # target tile (sublane padded)
        acc = (2 * b * c_pad * t + b * 8 * t) * 4
        return 2 * (x_buf + t_buf) + acc       # double-buffered inputs + scratch

    while tile > 128 and vmem_bytes(tile) > 24 * 1024 * 1024:
        tile //= 2
    return tile


def focal_tversky_loss(inputs, targets, *, alpha, beta, gamma, n_classes,
                       smooth=1e-5, tile_hw=None):
    B, C, H, W = inputs.shape
    assert C == n_classes, "channel dim of inputs must equal n_classes"
    HW = H * W

    # Free reshapes only: keep the caller's dtypes (bf16 probabilities and
    # int8 labels are supported and halve / quarter the HBM payload).
    x = inputs.reshape(B, C, HW)
    t = targets.reshape(B, 1, HW)
    if not jnp.issubdtype(t.dtype, jnp.integer):
        t = t.astype(jnp.int32)

    tile = tile_hw if tile_hw is not None else _choose_tile(HW, B, C,
                                                            x.dtype.itemsize)
    n_tiles = (HW + tile - 1) // tile
    n_outer = 1
    for cand in (8, 4, 2):             # parallel slices for megacore (v7x)
        if n_tiles % cand == 0:
            n_outer = cand
            break
    n_inner = n_tiles // n_outer
    need_mask = (HW % tile) != 0

    kernel = functools.partial(
        _focal_tversky_partial_kernel,
        hw=HW, n_inner=n_inner, n_tiles=n_tiles, need_mask=need_mask)

    partials = pl.pallas_call(
        kernel,
        out_shape=jax.ShapeDtypeStruct((n_outer, 8, 128), jnp.float32),
        grid_spec=pltpu.PrefetchScalarGridSpec(
            num_scalar_prefetch=0,
            grid=(n_outer, n_inner),
            in_specs=[
                pl.BlockSpec((B, C, tile), lambda o, i: (0, 0, o * n_inner + i)),
                pl.BlockSpec((B, 1, tile), lambda o, i: (0, 0, o * n_inner + i)),
            ],
            out_specs=pl.BlockSpec((1, 8, 128), lambda o, i: (o, 0, 0)),
            scratch_shapes=[
                pltpu.VMEM((B, C, tile), jnp.float32),   # acc_tp
                pltpu.VMEM((B, C, tile), jnp.float32),   # acc_x
                pltpu.VMEM((B, 1, tile), jnp.float32),   # acc_t
            ],
        ),
        compiler_params=pltpu.CompilerParams(
            dimension_semantics=("parallel", "arbitrary"),
            vmem_limit_bytes=32 * 1024 * 1024,
        ),
    )(x, t)

    # Tiny finalize in plain JAX (3 scalars per outer slice).
    tp = jnp.sum(partials[:, 0, 0])
    sum_x = jnp.sum(partials[:, 1, 0])
    sum_t = jnp.sum(partials[:, 2, 0])
    fp = sum_x - tp                       # sum((1 - onehot) * x)
    fn = sum_t - tp                       # sum(onehot * (1 - x))
    tversky = (tp + smooth) / (tp + alpha * fp + beta * fn + smooth)
    return (1.0 - tversky) ** gamma


def _reference(inputs, targets, *, alpha, beta, gamma, n_classes, smooth=1e-5):
    # pure-JAX reference mirroring the PyTorch forward
    onehot = jnp.concatenate(
        [(targets == i).astype(jnp.float32) for i in range(n_classes)], axis=1)
    x = inputs.astype(jnp.float32).flatten()
    t = onehot.flatten()
    tp = jnp.sum(x * t)
    fp = jnp.sum((1 - t) * x)
    fn = jnp.sum(t * (1 - x))
    tversky = (tp + smooth) / (tp + alpha * fp + beta * fn + smooth)
    return (1 - tversky) ** gamma


if __name__ == "__main__":
    # module "parameters" (deterministic, from __init__ signature)
    alpha, beta, gamma = 0.7, 0.3, 0.75
    n_classes = 4

    B, C, H, W = 2, n_classes, 16, 16
    key = jax.random.PRNGKey(0)
    k_in, k_tg = jax.random.split(key)

    # inputs: per-pixel class probabilities (softmax over channel dim, NCHW)
    logits = jax.random.normal(k_in, (B, C, H, W), dtype=jnp.float32)
    inputs = jax.nn.softmax(logits, axis=1)
    # targets: integer class labels (int8 payload — 1/4 the HBM traffic)
    targets = jax.random.randint(
        k_tg, (B, 1, H, W), 0, n_classes, dtype=jnp.int32).astype(jnp.int8)

    loss = focal_tversky_loss(inputs, targets, alpha=alpha, beta=beta,
                              gamma=gamma, n_classes=n_classes)
    loss = jax.block_until_ready(loss)

    ref = _reference(inputs, targets, alpha=alpha, beta=beta, gamma=gamma,
                     n_classes=n_classes)
    assert jnp.allclose(loss, ref, rtol=1e-4, atol=1e-6), (loss, ref)

    print("KERNEL_OK")
</pallas_src>

<mosaic_0001>
module attributes {stable_mosaic.version = 11 : i64} {
  func.func @_focal_tversky_partial_kernel(%arg0: i32, %arg1: i32, %arg2: memref<2x4x256xf32, #tpu.memory_space<vmem>>, %arg3: memref<2x1x256xi8, #tpu.memory_space<vmem>>, %arg4: memref<1x8x128xf32, #tpu.memory_space<vmem>>, %arg5: memref<2x4x256xf32, #tpu.memory_space<vmem>>, %arg6: memref<2x4x256xf32, #tpu.memory_space<vmem>>, %arg7: memref<2x1x256xf32, #tpu.memory_space<vmem>>) attributes {dimension_semantics = [#tpu.dimension_semantics<parallel>, #tpu.dimension_semantics<arbitrary>], iteration_bounds = array<i64: 1, 1>, scalar_prefetch = 0 : i64, scratch_operands = 3 : i64, tpu.core_type = #tpu.core_type<tc>, window_params = [{transform_indices = @transform_0, window_bounds = array<i64: 2, 4, 256>}, {transform_indices = @transform_1, window_bounds = array<i64: 2, 1, 256>}, {transform_indices = @transform_2, window_bounds = array<i64: 1, 8, 128>}]} {
    %c0_i32 = arith.constant 0 : i32
    %0 = arith.cmpi eq, %arg1, %c0_i32 : i32
    %1 = arith.extui %0 : i1 to i32
    %c0_i32_0 = arith.constant 0 : i32
    %2 = arith.cmpi ne, %1, %c0_i32_0 : i32
    scf.if %2 {
      %cst_27 = arith.constant 0.000000e+00 : f32
      %30 = vector.broadcast %cst_27 : f32 to vector<2x4x256xf32>
      %c0_28 = arith.constant 0 : index
      %c0_29 = arith.constant 0 : index
      %c0_30 = arith.constant 0 : index
      %31 = vector.load %arg5[%c0_28, %c0_29, %c0_30] : memref<2x4x256xf32, #tpu.memory_space<vmem>>, vector<2x4x256xf32>
      tpu.vector_store %arg5[%c0_28, %c0_29, %c0_30], %30 {strides = array<i32>} : memref<2x4x256xf32, #tpu.memory_space<vmem>>, vector<2x4x256xf32>,
      %cst_31 = arith.constant 0.000000e+00 : f32
      %32 = vector.broadcast %cst_31 : f32 to vector<2x4x256xf32>
      %c0_32 = arith.constant 0 : index
      %c0_33 = arith.constant 0 : index
      %c0_34 = arith.constant 0 : index
      %33 = vector.load %arg6[%c0_32, %c0_33, %c0_34] : memref<2x4x256xf32, #tpu.memory_space<vmem>>, vector<2x4x256xf32>
      tpu.vector_store %arg6[%c0_32, %c0_33, %c0_34], %32 {strides = array<i32>} : memref<2x4x256xf32, #tpu.memory_space<vmem>>, vector<2x4x256xf32>,
      %cst_35 = arith.constant 0.000000e+00 : f32
      %34 = vector.broadcast %cst_35 : f32 to vector<2x1x256xf32>
      %c0_36 = arith.constant 0 : index
      %c0_37 = arith.constant 0 : index
      %c0_38 = arith.constant 0 : index
      %35 = vector.load %arg7[%c0_36, %c0_37, %c0_38] : memref<2x1x256xf32, #tpu.memory_space<vmem>>, vector<2x1x256xf32>
      tpu.vector_store %arg7[%c0_36, %c0_37, %c0_38], %34 {strides = array<i32>} : memref<2x1x256xf32, #tpu.memory_space<vmem>>, vector<2x1x256xf32>,
    } else {
    }
    %c0 = arith.constant 0 : index
    %c0_1 = arith.constant 0 : index
    %c0_2 = arith.constant 0 : index
    %3 = vector.load %arg2[%c0, %c0_1, %c0_2] : memref<2x4x256xf32, #tpu.memory_space<vmem>>, vector<2x4x256xf32>
    %c0_3 = arith.constant 0 : index
    %c0_4 = arith.constant 0 : index
    %c0_5 = arith.constant 0 : index
    %4 = vector.load %arg3[%c0_3, %c0_4, %c0_5] : memref<2x1x256xi8, #tpu.memory_space<vmem>>, vector<2x1x256xi8>
    %5 = arith.extsi %4 : vector<2x1x256xi8> to vector<2x1x256xi32>
    %6 = tpu.iota {dimensions = array<i32: 1>} : vector<2x4x256xi32>
    %7 = vector.broadcast %5 : vector<2x1x256xi32> to vector<2x4x256xi32>
    %8 = arith.cmpi eq, %7, %6 : vector<2x4x256xi32>
    %c0_i32_6 = arith.constant 0 : i32
    %9 = vector.broadcast %c0_i32_6 : i32 to vector<2x1x256xi32>
    %10 = arith.cmpi sge, %5, %9 : vector<2x1x256xi32>
    %c4_i32 = arith.constant 4 : i32
    %11 = vector.broadcast %c4_i32 : i32 to vector<2x1x256xi32>
    %12 = arith.cmpi slt, %5, %11 : vector<2x1x256xi32>
    %13 = arith.andi %10, %12 : vector<2x1x256xi1>
    %c0_7 = arith.constant 0 : index
    %c0_8 = arith.constant 0 : index
    %c0_9 = arith.constant 0 : index
    %14 = vector.load %arg6[%c0_7, %c0_8, %c0_9] : memref<2x4x256xf32, #tpu.memory_space<vmem>>, vector<2x4x256xf32>
    %15 = arith.addf %14, %3 : vector<2x4x256xf32>
    %c0_10 = arith.constant 0 : index
    %c0_11 = arith.constant 0 : index
    %c0_12 = arith.constant 0 : index
    %16 = vector.load %arg6[%c0_10, %c0_11, %c0_12] : memref<2x4x256xf32, #tpu.memory_space<vmem>>, vector<2x4x256xf32>
    tpu.vector_store %arg6[%c0_10, %c0_11, %c0_12], %15 {strides = array<i32>} : memref<2x4x256xf32, #tpu.memory_space<vmem>>, vector<2x4x256xf32>,
    %c0_13 = arith.constant 0 : index
    %c0_14 = arith.constant 0 : index
    %c0_15 = arith.constant 0 : index
    %17 = vector.load %arg5[%c0_13, %c0_14, %c0_15] : memref<2x4x256xf32, #tpu.memory_space<vmem>>, vector<2x4x256xf32>
    %cst = arith.constant 0.000000e+00 : f32
    %18 = vector.broadcast %cst : f32 to vector<2x4x256xf32>
    %19 = arith.select %8, %3, %18 : vector<2x4x256xi1>, vector<2x4x256xf32>
    %20 = arith.addf %17, %19 : vector<2x4x256xf32>
    %c0_16 = arith.constant 0 : index
    %c0_17 = arith.constant 0 : index
    %c0_18 = arith.constant 0 : index
    %21 = vector.load %arg5[%c0_16, %c0_17, %c0_18] : memref<2x4x256xf32, #tpu.memory_space<vmem>>, vector<2x4x256xf32>
    tpu.vector_store %arg5[%c0_16, %c0_17, %c0_18], %20 {strides = array<i32>} : memref<2x4x256xf32, #tpu.memory_space<vmem>>, vector<2x4x256xf32>,
    %c0_19 = arith.constant 0 : index
    %c0_20 = arith.constant 0 : index
    %c0_21 = arith.constant 0 : index
    %22 = vector.load %arg7[%c0_19, %c0_20, %c0_21] : memref<2x1x256xf32, #tpu.memory_space<vmem>>, vector<2x1x256xf32>
    %23 = arith.extui %13 : vector<2x1x256xi1> to vector<2x1x256xi32>
    %24 = arith.sitofp %23 : vector<2x1x256xi32> to vector<2x1x256xf32>
    %25 = arith.addf %22, %24 : vector<2x1x256xf32>
    %c0_22 = arith.constant 0 : index
    %c0_23 = arith.constant 0 : index
    %c0_24 = arith.constant 0 : index
    %26 = vector.load %arg7[%c0_22, %c0_23, %c0_24] : memref<2x1x256xf32, #tpu.memory_space<vmem>>, vector<2x1x256xf32>
    tpu.vector_store %arg7[%c0_22, %c0_23, %c0_24], %25 {strides = array<i32>} : memref<2x1x256xf32, #tpu.memory_space<vmem>>, vector<2x1x256xf32>,
    %c0_i32_25 = arith.constant 0 : i32
    %27 = arith.cmpi eq, %arg1, %c0_i32_25 : i32
    %28 = arith.extui %27 : i1 to i32
    %c0_i32_26 = arith.constant 0 : i32
    %29 = arith.cmpi ne, %28, %c0_i32_26 : i32
    scf.if %29 {
      %c0_27 = arith.constant 0 : index
      %c0_28 = arith.constant 0 : index
      %c0_29 = arith.constant 0 : index
      %30 = vector.load %arg5[%c0_27, %c0_28, %c0_29] : memref<2x4x256xf32, #tpu.memory_space<vmem>>, vector<2x4x256xf32>
      %31 = vector.shape_cast %30 : vector<2x4x256xf32> to vector<1x2x4x256xf32>
      %cst_30 = arith.constant dense<0.000000e+00> : vector<1xf32>
      %32 = vector.multi_reduction <add>, %31, %cst_30 [1, 2, 3] : vector<1x2x4x256xf32> to vector<1xf32>
      %33 = vector.shape_cast %32 : vector<1xf32> to vector<1x1x1x1xf32>
      %34 = vector.extract %33[0, 0, 0, 0] : f32 from vector<1x1x1x1xf32>
      %c0_31 = arith.constant 0 : index
      %c0_32 = arith.constant 0 : index
      %c0_33 = arith.constant 0 : index
      %35 = vector.load %arg6[%c0_31, %c0_32, %c0_33] : memref<2x4x256xf32, #tpu.memory_space<vmem>>, vector<2x4x256xf32>
      %36 = vector.shape_cast %35 : vector<2x4x256xf32> to vector<1x2x4x256xf32>
      %cst_34 = arith.constant dense<0.000000e+00> : vector<1xf32>
      %37 = vector.multi_reduction <add>, %36, %cst_34 [1, 2, 3] : vector<1x2x4x256xf32> to vector<1xf32>
      %38 = vector.shape_cast %37 : vector<1xf32> to vector<1x1x1x1xf32>
      %39 = vector.extract %38[0, 0, 0, 0] : f32 from vector<1x1x1x1xf32>
      %c0_35 = arith.constant 0 : index
      %c0_36 = arith.constant 0 : index
      %c0_37 = arith.constant 0 : index
      %40 = vector.load %arg7[%c0_35, %c0_36, %c0_37] : memref<2x1x256xf32, #tpu.memory_space<vmem>>, vector<2x1x256xf32>
      %41 = vector.shape_cast %40 : vector<2x1x256xf32> to vector<1x2x1x256xf32>
      %cst_38 = arith.constant dense<0.000000e+00> : vector<1xf32>
      %42 = vector.multi_reduction <add>, %41, %cst_38 [1, 2, 3] : vector<1x2x1x256xf32> to vector<1xf32>
      %43 = vector.shape_cast %42 : vector<1xf32> to vector<1x1x1x1xf32>
      %44 = vector.extract %43[0, 0, 0, 0] : f32 from vector<1x1x1x1xf32>
      %45 = tpu.iota {dimensions = array<i32: 0>} : vector<8x128xi32>
      %c0_i32_39 = arith.constant 0 : i32
      %46 = vector.broadcast %c0_i32_39 : i32 to vector<8x128xi32>
      %47 = arith.cmpi eq, %45, %46 : vector<8x128xi32>
      %c1_i32 = arith.constant 1 : i32
      %48 = vector.broadcast %c1_i32 : i32 to vector<8x128xi32>
      %49 = arith.cmpi eq, %45, %48 : vector<8x128xi32>
      %c2_i32 = arith.constant 2 : i32
      %50 = vector.broadcast %c2_i32 : i32 to vector<8x128xi32>
      %51 = arith.cmpi eq, %45, %50 : vector<8x128xi32>
      %cst_40 = arith.constant 0.000000e+00 : f32
      %52 = vector.broadcast %44 : f32 to vector<8x128xf32>
      %53 = vector.broadcast %cst_40 : f32 to vector<8x128xf32>
      %54 = arith.select %51, %52, %53 : vector<8x128xi1>, vector<8x128xf32>
      %55 = vector.broadcast %39 : f32 to vector<8x128xf32>
      %56 = arith.select %49, %55, %54 : vector<8x128xi1>, vector<8x128xf32>
      %57 = vector.broadcast %34 : f32 to vector<8x128xf32>
      %58 = arith.select %47, %57, %56 : vector<8x128xi1>, vector<8x128xf32>
      %c0_41 = arith.constant 0 : index
      %c0_42 = arith.constant 0 : index
      %c0_43 = arith.constant 0 : index
      %59 = vector.load %arg4[%c0_41, %c0_42, %c0_43] : memref<1x8x128xf32, #tpu.memory_space<vmem>>, vector<1x8x128xf32>
      %60 = vector.shape_cast %59 : vector<1x8x128xf32> to vector<8x128xf32>
      %61 = vector.shape_cast %58 : vector<8x128xf32> to vector<1x8x128xf32>
      tpu.vector_store %arg4[%c0_41, %c0_42, %c0_43], %61 {strides = array<i32>} : memref<1x8x128xf32, #tpu.memory_space<vmem>>, vector<1x8x128xf32>,
    } else {
    }
    return
  }
  func.func @transform_0(%arg0: i32, %arg1: i32) -> (i32, i32, i32) {
    %c1_i32 = arith.constant 1 : i32
    %0 = arith.muli %arg0, %c1_i32 : i32
    %1 = arith.addi %0, %arg1 : i32
    %c0_i32 = arith.constant 0 : i32
    %c0_i32_0 = arith.constant 0 : i32
    %c0_i32_1 = arith.constant 0 : i32
    return %c0_i32, %c0_i32_0, %1 : i32, i32, i32
  }
  func.func @transform_1(%arg0: i32, %arg1: i32) -> (i32, i32, i32) {
    %c1_i32 = arith.constant 1 : i32
    %0 = arith.muli %arg0, %c1_i32 : i32
    %1 = arith.addi %0, %arg1 : i32
    %c0_i32 = arith.constant 0 : i32
    %c0_i32_0 = arith.constant 0 : i32
    %c0_i32_1 = arith.constant 0 : i32
    return %c0_i32, %c0_i32_0, %1 : i32, i32, i32
  }
  func.func @transform_2(%arg0: i32, %arg1: i32) -> (i32, i32, i32) {
    %c0_i32 = arith.constant 0 : i32
    %c0_i32_0 = arith.constant 0 : i32
    %c0_i32_1 = arith.constant 0 : i32
    return %arg0, %c0_i32, %c0_i32_0 : i32, i32, i32
  }
}

</mosaic_0001>

<llo_original>
// kernel: tpu_custom_call.1
$region0: #{tpu_custom_call.1}
  #allocation0 [shape = 'u32[]', space=smem, size = 0x4, offset = 0x4, fixed_abs, tag = 'smem constant byte address 0x4 - core index']
  #allocation1 [shape = 'u32[144,128]{1,0:T(1,128)}', space=vmem, size = 0x12000, scoped, tag = 'internal scratch']
  #allocation2 [shape = 'f32[2,4,256]{2,1,0:T(4,128)}', space=vmem, size = 0x2000, scoped, tag = 'scratch operand']
  #allocation3 [shape = 'f32[2,4,256]{2,1,0:T(4,128)}', space=vmem, size = 0x2000, scoped, tag = 'scratch operand']
  #allocation4 [shape = 'f32[2,1,256]{2,1,0:T(1,128)}', space=vmem, size = 0x800, scoped, tag = 'scratch operand']
  %s0 = inlined_call_operand.hbm [shape: f32[2,4,256], index: 0, kind: input, shape index: {}]
  %s1 = inlined_call_operand.vmem [shape: s8[2,1,256], index: 1, kind: input, shape index: {}]
  %s2 = inlined_call_operand.hbm [shape: f32[1,8,128], index: 2, kind: output, shape index: {}]
  %s3 = sld [smem:[#allocation0]]
  $region30: #{tpu_custom_call.1} parent=0
    _
  %s5 = ssub.s32 1, %s3
  %s6 = scalar_select 0, %s5, %s3
  $region1: #{tpu_custom_call.1} parent=0
    #allocation5 [shape = 'u8[8192]{0}', space=vmem, size = 0x2000, scoped, tag = 'input window, operand 0, single buffered']
    #allocation6 [shape = 's32[1]{0}', space=sflag, size = 0x4, scoped, tag = 'scoped memory for tpu_custom_call.1']
    #allocation7 [shape = 's32[1]{0}', space=sflag, size = 0x4, scoped, tag = 'scoped memory for tpu_custom_call.1']
    #allocation8 [shape = 'u8[4096]{0}', space=vmem, size = 0x1000, scoped, tag = 'output window, operand 0, single buffered']
    %7 = vsyncpa [#allocation6], 0
    %8 = vsyncpa [#allocation7], 0
    // Predicated region
    $region2: #{tpu_custom_call.1} parent=1 // pred_check
      _
    $region3: #{tpu_custom_call.1} parent=1 // pred_check_branch
      %10 = sbr.rel (0) target = $region5
    $region4: #{tpu_custom_call.1} parent=1 // pred_region
      %s11 = sadd.s32 0, 0
      %s12 = smul.u32 2, %s11
      %s14 = ssub.s32 256, 256
      %15 = vsyncadd [#allocation6], %s14
      %s16 = smul.addr %s12, 64
      %s17 = scalar_lea.hbm %s0, %s16
      %s18 = sshll.u32 [#allocation5], 4
      %s19 = int_to_ptr.vmem [resolvable:$true] %s18
      %24 = dma.hbm_to_vmem [thread:$0]  %s17, 256, %s19, [#allocation6], 128, 128, 8
    $region5: #{tpu_custom_call.1} parent=1 // pred_fallthru
      _
    // Predicated region
    $region6: #{tpu_custom_call.1} parent=1 // pred_check
      _
    $region7: #{tpu_custom_call.1} parent=1 // pred_check_branch
      %26 = sbr.rel (0) target = $region9
    $region8: #{tpu_custom_call.1} parent=1 // pred_region
      %s27 = sadd.s32 0, 0
      %s28 = smul.u32 2, %s27
      %p29 = scmp.lt.s32.totalorder %s28, 1
      %s30 = scalar_select %p29, %s28, 1
      %s31 = scalar_lea.vmem %s1, %s30
      %s32 = sadd.s32 0, 0
      %s33 = smul.u32 2, %s32
    $region9: #{tpu_custom_call.1} parent=1 // pred_fallthru
      _
    // Predicated region
    $region10: #{tpu_custom_call.1} parent=1 // pred_check
      _
    $region11: #{tpu_custom_call.1} parent=1 // pred_check_branch
      %35 = sbr.rel (0) target = $region13
    $region12: #{tpu_custom_call.1} parent=1 // pred_region
      %36 = dma.done [#allocation6], 256
    $region13: #{tpu_custom_call.1} parent=1 // pred_fallthru
      _
    %s37 = sadd.s32 0, 0
    %s38 = smul.u32 2, %s37
    %p39 = scmp.lt.s32.totalorder %s38, 1
    %s40 = scalar_select %p39, %s38, 1
    %s41 = scalar_lea.vmem %s1, %s40
    %s42 = sadd.s32 0, 0
    %s43 = smul.u32 2, %s42
    %s44 = sadd.s32 0, 0
    %s45 = smul.u32 2, %s44
    %p46 = scmp.lt.s32.totalorder %s45, 1
    %s47 = scalar_select %p46, %s45, 1
    %s48 = scalar_lea.vmem %s1, %s47
    %s49 = sadd.s32 0, 0
    %s50 = smul.u32 2, %s49
    %p51 = scmp.eq.s32.totalorder 0, 0
    // Predicated region
    $region14: #{tpu_custom_call.1} parent=1 // pred_check
      %p52 = pneg %p51
    $region15: #{tpu_custom_call.1} parent=1 // pred_check_branch
      %54 = sbr.rel (%p52) target = $region17
    $region16: #{tpu_custom_call.1} parent=1 // pred_region
      %55 = vst [vmem:[#allocation2] sm:$0xff] 0.0
      %56 = vst [vmem:[#allocation2 + $0x8] sm:$0xff] 0.0
      %57 = vst [vmem:[#allocation3] sm:$0xff] 0.0
      %58 = vst [vmem:[#allocation3 + $0x8] sm:$0xff] 0.0
      %v59 = vlaneseq
      %vm60 = vcmp.ge.s32.totalorder %v59, 0
      %vm61 = vcmp.lt.s32.totalorder %v59, 256
      %vm62 = vmand %vm60, %vm61
      %63 = vst.msk [vmem:[#allocation4] sm:$0x3] %vm62, 0.0
      %64 = vst.msk [vmem:[#allocation4 + $0x2] sm:$0x3] %vm62, 0.0
    $region17: #{tpu_custom_call.1} parent=1 // pred_fallthru
      _
    %v65 = vld [vmem:[#allocation5] sm:$0xff]
    %v66 = vld [vmem:[#allocation5 + $0x8] sm:$0xff]
    %v67 = vld [vmem:[%s48] sm:$0x3]
    %v68 = vld [vmem:[%s48 + $0x2] sm:$0x3]
    %v69 = vunpack.c.0.s8 %v67
    %v70 = vunpack.c.0.s8 %v68
    %v71 = vlaneseq
    %v72 = vshrl.u32 %v71, 7
    %v73 = vlaneseq
    %v74 = vshrl.u32 %v73, 7
    %v75 = vsub.s32 0, %v74
    %v76 = vrot.slane %v69, %v75
    %v77 = vlaneseq
    %v78 = vshrl.u32 %v77, 7
    %v79 = vsub.s32 4, %v78
    %v80 = vrot.slane %v69, %v79
    %v81 = vlaneseq
    %v82 = vshrl.u32 %v81, 7
    %v83 = vsub.s32 0, %v82
    %v84 = vrot.slane %v70, %v83
    %v85 = vlaneseq
    %v86 = vshrl.u32 %v85, 7
    %v87 = vsub.s32 4, %v86
    %v88 = vrot.slane %v70, %v87
    %v89 = vlaneseq
    %v90 = vshrl.u32 %v89, 7
    %v91 = vsub.s32 0, %v90
    %v92 = vrot.slane %v76, %v91
    %v93 = vlaneseq
    %v94 = vshrl.u32 %v93, 7
    %v95 = vsub.s32 0, %v94
    %v96 = vrot.slane %v80, %v95
    %v97 = vlaneseq
    %v98 = vshrl.u32 %v97, 7
    %v99 = vsub.s32 0, %v98
    %v100 = vrot.slane %v84, %v99
    %v101 = vlaneseq
    %v102 = vshrl.u32 %v101, 7
    %v103 = vsub.s32 0, %v102
    %v104 = vrot.slane %v88, %v103
    %vm105 = vcmp.eq.s32.totalorder %v92, %v72
    %vm106 = vcmp.eq.s32.totalorder %v96, %v72
    %vm107 = vcmp.eq.s32.totalorder %v100, %v72
    %vm108 = vcmp.eq.s32.totalorder %v104, %v72
    %vm109 = vcmp.ge.s32.totalorder %v69, 0
    %vm110 = vcmp.ge.s32.totalorder %v70, 0
    %vm111 = vcmp.lt.s32.totalorder %v69, 4
    %vm112 = vcmp.lt.s32.totalorder %v70, 4
    %vm113 = vmand %vm109, %vm111
    %vm114 = vmand %vm110, %vm112
    %v115 = vld [vmem:[#allocation3] sm:$0xff]
    %v116 = vld [vmem:[#allocation3 + $0x8] sm:$0xff]
    %v117 = vadd.f32 %v115, %v65
    %v118 = vadd.f32 %v116, %v66
    %119 = vst [vmem:[#allocation3] sm:$0xff] %v117
    %120 = vst [vmem:[#allocation3 + $0x8] sm:$0xff] %v118
    %v121 = vld [vmem:[#allocation2] sm:$0xff]
    %v122 = vld [vmem:[#allocation2 + $0x8] sm:$0xff]
    %v125 = vcombine.high %v65, %v65
    %v126 = vcombine.high %v66, %v66
    %v129 = vsel %vm105, %v65, 0.0
    %v130 = vsel %vm106, %v125, 0.0
    %v131 = vsel %vm107, %v66, 0.0
    %v132 = vsel %vm108, %v126, 0.0
    %v137 = vcombine.low %v129, %v130
    %v138 = vcombine.low %v131, %v132
    %v141 = vadd.f32 %v121, %v137
    %v142 = vadd.f32 %v122, %v138
    %143 = vst [vmem:[#allocation2] sm:$0xff] %v141
    %144 = vst [vmem:[#allocation2 + $0x8] sm:$0xff] %v142
    %v145 = vld [vmem:[#allocation4] sm:$0x3]
    %v146 = vld [vmem:[#allocation4 + $0x2] sm:$0x3]
    %v147 = vsel %vm113, 1, 0
    %v148 = vsel %vm114, 1, 0
    %v149 = vcvt.s32.f32 %v147
    %v150 = vcvt.s32.f32 %v148
    %v154 = vunpack.c.l.s4 1966171168
    %v155 = vunpack.c.0.s8 %v154
    %v156 = vlaneseq
    %v157 = vshrl.u32 %v156, 7
    %v158 = vsub.s32 %v155, %v157
    %v159 = vrot.slane %v149, %v158
    %v161 = vunpack.c.l.s4 1966171168
    %v162 = vunpack.c.0.s8 %v161
    %v163 = vlaneseq
    %v164 = vshrl.u32 %v163, 7
    %v165 = vsub.s32 %v162, %v164
    %v166 = vrot.slane %v159, %v165
    %v168 = vunpack.c.l.s4 1966171168
    %v169 = vunpack.c.0.s8 %v168
    %v170 = vlaneseq
    %v171 = vshrl.u32 %v170, 7
    %v172 = vsub.s32 %v169, %v171
    %v173 = vrot.slane %v150, %v172
    %v175 = vunpack.c.l.s4 1966171168
    %v176 = vunpack.c.0.s8 %v175
    %v177 = vlaneseq
    %v178 = vshrl.u32 %v177, 7
    %v179 = vsub.s32 %v176, %v178
    %v180 = vrot.slane %v173, %v179
    %v183 = vadd.f32 %v145, %v166
    %v184 = vadd.f32 %v146, %v180
    %v185 = vlaneseq
    %vm186 = vcmp.ge.s32.totalorder %v185, 0
    %vm187 = vcmp.lt.s32.totalorder %v185, 256
    %vm188 = vmand %vm186, %vm187
    %189 = vst.msk [vmem:[#allocation4] sm:$0x3] %vm188, %v183
    %190 = vst.msk [vmem:[#allocation4 + $0x2] sm:$0x3] %vm188, %v184
    // Predicated region
    $region18: #{tpu_custom_call.1} parent=1 // pred_check
      %p191 = pneg %p51
    $region19: #{tpu_custom_call.1} parent=1 // pred_check_branch
      %193 = sbr.rel (%p191) target = $region21
    $region20: #{tpu_custom_call.1} parent=1 // pred_region
      %v194 = vld [vmem:[#allocation2] sm:$0xff]
      %v195 = vld [vmem:[#allocation2 + $0x8] sm:$0xff]
      %v198 = vcombine.high %v194, %v194
      %v199 = vcombine.high %v195, %v195
      %vm202 = vcmask 1043456
      %v203 = vsel %vm202, %v194, 0.0
      %v204 = vsel %vm202, %v198, 0.0
      %v205 = vadd.f32 %v203, %v204
      %v206 = vsel %vm202, %v195, 0.0
      %v207 = vadd.f32 %v205, %v206
      %v208 = vsel %vm202, %v199, 0.0
      %v209 = vadd.f32 %v207, %v208
      %210 = vadd.xlane.f32.xlu0 %v209
      %v211 = vpop.xlane.xlu0 %210
      %v212 = vrot.slane %v211, 4
      %v213 = vadd.f32 %v211, %v212
      %v214 = vrot.slane %v213, 2
      %v215 = vadd.f32 %v213, %v214
      %v216 = vrot.slane %v215, 1
      %v217 = vadd.f32 %v215, %v216
      %s218 = vtos %v217
      %v219 = vld [vmem:[#allocation3] sm:$0xff]
      %v220 = vld [vmem:[#allocation3 + $0x8] sm:$0xff]
      %v223 = vcombine.high %v219, %v219
      %v224 = vcombine.high %v220, %v220
      %v227 = vsel %vm202, %v219, 0.0
      %v228 = vsel %vm202, %v223, 0.0
      %v229 = vadd.f32 %v227, %v228
      %v230 = vsel %vm202, %v220, 0.0
      %v231 = vadd.f32 %v229, %v230
      %v232 = vsel %vm202, %v224, 0.0
      %v233 = vadd.f32 %v231, %v232
      %234 = vadd.xlane.f32.xlu0 %v233
      %v235 = vpop.xlane.xlu0 %234
      %v236 = vrot.slane %v235, 4
      %v237 = vadd.f32 %v235, %v236
      %v238 = vrot.slane %v237, 2
      %v239 = vadd.f32 %v237, %v238
      %v240 = vrot.slane %v239, 1
      %v241 = vadd.f32 %v239, %v240
      %s242 = vtos %v241
      %v243 = vld [vmem:[#allocation4] sm:$0x3]
      %v244 = vld [vmem:[#allocation4 + $0x2] sm:$0x3]
      %v247 = vlaneseq
      %v248 = vshrl.u32 %v247, 7
      %v249 = vsub.s32 0, %v248
      %v250 = vrot.slane %v243, %v249
      %v251 = vlaneseq
      %v252 = vshrl.u32 %v251, 7
      %v253 = vsub.s32 1, %v252
      %v254 = vrot.slane %v243, %v253
      %v255 = vlaneseq
      %v256 = vshrl.u32 %v255, 7
      %v257 = vsub.s32 0, %v256
      %v258 = vrot.slane %v244, %v257
      %v259 = vlaneseq
      %v260 = vshrl.u32 %v259, 7
      %v261 = vsub.s32 1, %v260
      %v262 = vrot.slane %v244, %v261
      %vm267 = vcmask 1040384
      %v268 = vsel %vm267, %v250, 0.0
      %v269 = vsel %vm267, %v254, 0.0
      %v270 = vadd.f32 %v268, %v269
      %v271 = vsel %vm267, %v258, 0.0
      %v272 = vadd.f32 %v270, %v271
      %v273 = vsel %vm267, %v262, 0.0
      %v274 = vadd.f32 %v272, %v273
      %275 = vadd.xlane.f32.xlu0 %v274
      %v276 = vpop.xlane.xlu0 %275
      %v277 = vrot.slane %v276, 4
      %v278 = vadd.f32 %v276, %v277
      %v279 = vrot.slane %v278, 2
      %v280 = vadd.f32 %v278, %v279
      %v281 = vrot.slane %v280, 1
      %v282 = vadd.f32 %v280, %v281
      %s283 = vtos %v282
      %vm284 = vcmp.eq.s32.totalorder %v72, 0
      %vm285 = vcmp.eq.s32.totalorder %v72, 1
      %vm286 = vcmp.eq.s32.totalorder %v72, 2
      %v287 = vstv %s283
      %v288 = vsel %vm286, %v287, 0.0
      %v289 = vstv %s242
      %v290 = vsel %vm285, %v289, %v288
      %v291 = vstv %s218
      %v292 = vsel %vm284, %v291, %v290
      %293 = vst [vmem:[#allocation8] sm:$0xff] %v292
    $region21: #{tpu_custom_call.1} parent=1 // pred_fallthru
      _
    // Predicated region
    $region22: #{tpu_custom_call.1} parent=1 // pred_check
      _
    $region23: #{tpu_custom_call.1} parent=1 // pred_check_branch
      %295 = sbr.rel (0) target = $region25
    $region24: #{tpu_custom_call.1} parent=1 // pred_region
      %s297 = ssub.s32 128, 128
      %298 = vsyncadd [#allocation7], %s297
      %s300 = sshll.u32 [#allocation8], 4
      %s301 = int_to_ptr.vmem [resolvable:$true] %s300
      %303 = dma.vmem_to_hbm [thread:$0]  %s301, 128, %s2, [#allocation7]
    $region25: #{tpu_custom_call.1} parent=1 // pred_fallthru
      _
    // Predicated region
    $region26: #{tpu_custom_call.1} parent=1 // pred_check
      _
    $region27: #{tpu_custom_call.1} parent=1 // pred_check_branch
      %305 = sbr.rel (0) target = $region29
    $region28: #{tpu_custom_call.1} parent=1 // pred_region
      %306 = dma.done [#allocation7], 128
    $region29: #{tpu_custom_call.1} parent=1 // pred_fallthru
      _
    %307 = vsyncpa [#allocation6], 1
    %308 = vsyncpa [#allocation7], 1

</llo_original>
